<compile_context>
chip_gen: v7x
topology: tpu7x:2x2x1
jax: 0.10.0
libtpu: 0.0.40
codegen_flags: <defaults>
</compile_context>

<pallas_src>
import jax
import jax.numpy as jnp
from jax.experimental import pallas as pl
from jax.experimental.pallas import tpu as pltpu

IN_FEATURES = 10
HIDDEN = 6
OUT_FEATURES = 6
LANES = 128  # output features padded to one full lane slab -> unmasked stores


def _round_up(x, m):
    return (x + m - 1) // m * m


def mlp2_kernel(x_ref, w1_ref, b1_ref, w2_ref, b2_ref, o_ref):
    # Fused fc1 -> ReLU -> fc2 on one batch tile. Weights/biases are tiny and
    # stay VMEM-resident across all grid steps (constant index_map).
    x = x_ref[...]                                                    # (TB, 10) f32
    h1 = jnp.dot(x, w1_ref[...], preferred_element_type=jnp.float32)
    h1 = jnp.maximum(h1 + b1_ref[...], 0.0)                           # (TB, 6) ReLU
    # w2/b2 arrive zero-padded to 128 output lanes -> the store below is a
    # full, lane-dense 128-wide vector store (biggest measured store lever).
    h2 = jnp.dot(h1, w2_ref[...], preferred_element_type=jnp.float32) + b2_ref[...]
    o_ref[...] = h2.astype(o_ref.dtype)                               # (TB, 128)


def mlp2_forward(x, w1_t, b1, w2_t, b2, *, block_rows=4096):
    """x: (B, 10) f32; w1_t: (10, 6); b1: (1, 6); w2_t: (6, 6); b2: (1, 6)."""
    B = x.shape[0]

    # --- lane-dense output: zero-pad fc2 weights/bias from 6 -> 128 columns ---
    w2_p = jnp.zeros((HIDDEN, LANES), x.dtype).at[:, :OUT_FEATURES].set(w2_t)
    b2_p = jnp.zeros((1, LANES), x.dtype).at[:, :OUT_FEATURES].set(b2)

    # --- batch tiling: large multiple-of-8 blocks, software-pipelined grid ---
    tb = min(block_rows, _round_up(B, 8))
    b_pad = _round_up(B, tb)
    if b_pad != B:
        x = jnp.pad(x, ((0, b_pad - B), (0, 0)))
    grid = (b_pad // tb,)

    cost = pl.CostEstimate(
        flops=2 * b_pad * (IN_FEATURES * HIDDEN + HIDDEN * OUT_FEATURES),
        transcendentals=0,
        bytes_accessed=4 * b_pad * (IN_FEATURES + LANES),
    )

    out = pl.pallas_call(
        mlp2_kernel,
        out_shape=jax.ShapeDtypeStruct((b_pad, LANES), jnp.float32),
        grid=grid,
        in_specs=[
            pl.BlockSpec((tb, IN_FEATURES), lambda i: (i, 0)),      # batch-tiled x
            pl.BlockSpec((IN_FEATURES, HIDDEN), lambda i: (0, 0)),  # VMEM-resident
            pl.BlockSpec((1, HIDDEN), lambda i: (0, 0)),
            pl.BlockSpec((HIDDEN, LANES), lambda i: (0, 0)),
            pl.BlockSpec((1, LANES), lambda i: (0, 0)),
        ],
        out_specs=pl.BlockSpec((tb, LANES), lambda i: (i, 0)),
        compiler_params=pltpu.CompilerParams(
            # Batch tiles are fully independent -> shard across v7x's two
            # TensorCores; harmless no-op on single-TC v5e / v6e.
            dimension_semantics=("parallel",),
            # ~4.5 MiB live at TB=4096 double-buffered: fits v7x's 64 MiB VMEM
            # with large headroom; raise v5e's 16 MiB scoped default anyway.
            vmem_limit_bytes=32 * 1024 * 1024,
        ),
        cost_estimate=cost,
    )(x, w1_t, b1, w2_p, b2_p)

    # Wrapper-side: drop batch padding and the 122 zero lanes.
    return out[:B, :OUT_FEATURES]


def init_params(key):
    # Deterministic init mimicking nn.Linear's U(-1/sqrt(fan_in), 1/sqrt(fan_in)).
    k1, k2, k3, k4 = jax.random.split(key, 4)
    bound1 = 1.0 / jnp.sqrt(10.0)
    bound2 = 1.0 / jnp.sqrt(6.0)
    w1_t = jax.random.uniform(k1, (IN_FEATURES, HIDDEN), jnp.float32, -bound1, bound1)
    b1 = jax.random.uniform(k2, (1, HIDDEN), jnp.float32, -bound1, bound1)
    w2_t = jax.random.uniform(k3, (HIDDEN, OUT_FEATURES), jnp.float32, -bound2, bound2)
    b2 = jax.random.uniform(k4, (1, OUT_FEATURES), jnp.float32, -bound2, bound2)
    return w1_t, b1, w2_t, b2


def _ref_forward(x, w1_t, b1, w2_t, b2):
    return jnp.maximum(x @ w1_t + b1, 0.0) @ w2_t + b2


if __name__ == "__main__":
    key = jax.random.PRNGKey(0)
    key_x, key_x2, key_p = jax.random.split(key, 3)
    w1_t, b1, w2_t, b2 = init_params(key_p)

    # Small demo batch consistent with the tiny module spec.
    B = 8
    x = jax.random.normal(key_x, (B, IN_FEATURES), jnp.float32)
    out = jax.block_until_ready(mlp2_forward(x, w1_t, b1, w2_t, b2))
    ref = _ref_forward(x, w1_t, b1, w2_t, b2)
    assert out.shape == (B, OUT_FEATURES)
    assert jnp.allclose(out, ref, atol=1e-5, rtol=1e-5)

    # Exercise the batch-padding + multi-step pipelined-grid path.
    B2 = 1000
    x2 = jax.random.normal(key_x2, (B2, IN_FEATURES), jnp.float32)
    out2 = jax.block_until_ready(
        mlp2_forward(x2, w1_t, b1, w2_t, b2, block_rows=256)
    )
    ref2 = _ref_forward(x2, w1_t, b1, w2_t, b2)
    assert out2.shape == (B2, OUT_FEATURES)
    assert jnp.allclose(out2, ref2, atol=1e-5, rtol=1e-5)

    print("KERNEL_OK")
</pallas_src>

<mosaic_0001>
module attributes {stable_mosaic.version = 11 : i64} {
  func.func @mlp2_kernel(%arg0: i32, %arg1: memref<8x10xf32, #tpu.memory_space<vmem>>, %arg2: memref<10x6xf32, #tpu.memory_space<vmem>>, %arg3: memref<1x6xf32, #tpu.memory_space<vmem>>, %arg4: memref<6x128xf32, #tpu.memory_space<vmem>>, %arg5: memref<1x128xf32, #tpu.memory_space<vmem>>, %arg6: memref<8x128xf32, #tpu.memory_space<vmem>>) attributes {dimension_semantics = [#tpu.dimension_semantics<parallel>], iteration_bounds = array<i64: 1>, scalar_prefetch = 0 : i64, scratch_operands = 0 : i64, tpu.core_type = #tpu.core_type<tc>, window_params = [{transform_indices = @transform_0, window_bounds = array<i64: 8, 10>}, {pipeline_mode = #tpu.pipeline_mode<synchronous>, transform_indices = @transform_1, window_bounds = array<i64: 10, 6>}, {pipeline_mode = #tpu.pipeline_mode<synchronous>, transform_indices = @transform_2, window_bounds = array<i64: 1, 6>}, {pipeline_mode = #tpu.pipeline_mode<synchronous>, transform_indices = @transform_3, window_bounds = array<i64: 6, 128>}, {pipeline_mode = #tpu.pipeline_mode<synchronous>, transform_indices = @transform_4, window_bounds = array<i64: 1, 128>}, {transform_indices = @transform_5, window_bounds = array<i64: 8, 128>}]} {
    %c0 = arith.constant 0 : index
    %c0_0 = arith.constant 0 : index
    %0 = vector.load %arg1[%c0, %c0_0] : memref<8x10xf32, #tpu.memory_space<vmem>>, vector<8x10xf32>
    %c0_1 = arith.constant 0 : index
    %c0_2 = arith.constant 0 : index
    %1 = vector.load %arg2[%c0_1, %c0_2] : memref<10x6xf32, #tpu.memory_space<vmem>>, vector<10x6xf32>
    %cst = arith.constant dense<0.000000e+00> : vector<8x6xf32>
    %2 = tpu.matmul %0, %1, %cst {dimension_numbers = #tpu.dot_dimension_numbers<[1], [0], [0], [1], [0, 0, 1, 1], [], []>} : vector<8x10xf32>, vector<10x6xf32>, vector<8x6xf32> -> vector<8x6xf32>
    %c0_3 = arith.constant 0 : index
    %c0_4 = arith.constant 0 : index
    %3 = vector.load %arg3[%c0_3, %c0_4] : memref<1x6xf32, #tpu.memory_space<vmem>>, vector<1x6xf32>
    %4 = vector.broadcast %3 : vector<1x6xf32> to vector<8x6xf32>
    %5 = arith.addf %2, %4 : vector<8x6xf32>
    %cst_5 = arith.constant 0.000000e+00 : f32
    %6 = vector.broadcast %cst_5 : f32 to vector<8x6xf32>
    %7 = arith.maximumf %5, %6 : vector<8x6xf32>
    %c0_6 = arith.constant 0 : index
    %c0_7 = arith.constant 0 : index
    %8 = vector.load %arg4[%c0_6, %c0_7] : memref<6x128xf32, #tpu.memory_space<vmem>>, vector<6x128xf32>
    %cst_8 = arith.constant dense<0.000000e+00> : vector<8x128xf32>
    %9 = tpu.matmul %7, %8, %cst_8 {dimension_numbers = #tpu.dot_dimension_numbers<[1], [0], [0], [1], [0, 0, 1, 1], [], []>} : vector<8x6xf32>, vector<6x128xf32>, vector<8x128xf32> -> vector<8x128xf32>
    %c0_9 = arith.constant 0 : index
    %c0_10 = arith.constant 0 : index
    %10 = vector.load %arg5[%c0_9, %c0_10] : memref<1x128xf32, #tpu.memory_space<vmem>>, vector<1x128xf32>
    %11 = vector.broadcast %10 : vector<1x128xf32> to vector<8x128xf32>
    %12 = arith.addf %9, %11 : vector<8x128xf32>
    %c0_11 = arith.constant 0 : index
    %c0_12 = arith.constant 0 : index
    %13 = vector.load %arg6[%c0_11, %c0_12] : memref<8x128xf32, #tpu.memory_space<vmem>>, vector<8x128xf32>
    tpu.vector_store %arg6[%c0_11, %c0_12], %12 {strides = array<i32>} : memref<8x128xf32, #tpu.memory_space<vmem>>, vector<8x128xf32>,
    return
  }
  func.func @transform_0(%arg0: i32) -> (i32, i32) {
    %c0_i32 = arith.constant 0 : i32
    %c0_i32_0 = arith.constant 0 : i32
    return %arg0, %c0_i32 : i32, i32
  }
  func.func @transform_1(%arg0: i32) -> (i32, i32) {
    %c0_i32 = arith.constant 0 : i32
    %c0_i32_0 = arith.constant 0 : i32
    %c0_i32_1 = arith.constant 0 : i32
    return %c0_i32, %c0_i32_0 : i32, i32
  }
  func.func @transform_2(%arg0: i32) -> (i32, i32) {
    %c0_i32 = arith.constant 0 : i32
    %c0_i32_0 = arith.constant 0 : i32
    %c0_i32_1 = arith.constant 0 : i32
    return %c0_i32, %c0_i32_0 : i32, i32
  }
  func.func @transform_3(%arg0: i32) -> (i32, i32) {
    %c0_i32 = arith.constant 0 : i32
    %c0_i32_0 = arith.constant 0 : i32
    %c0_i32_1 = arith.constant 0 : i32
    return %c0_i32, %c0_i32_0 : i32, i32
  }
  func.func @transform_4(%arg0: i32) -> (i32, i32) {
    %c0_i32 = arith.constant 0 : i32
    %c0_i32_0 = arith.constant 0 : i32
    %c0_i32_1 = arith.constant 0 : i32
    return %c0_i32, %c0_i32_0 : i32, i32
  }
  func.func @transform_5(%arg0: i32) -> (i32, i32) {
    %c0_i32 = arith.constant 0 : i32
    %c0_i32_0 = arith.constant 0 : i32
    return %arg0, %c0_i32 : i32, i32
  }
}

</mosaic_0001>

<llo_original>
// kernel: tpu_custom_call.1
$region0: #{tpu_custom_call.1}
  #allocation0 [shape = 'u32[]', space=smem, size = 0x4, offset = 0x4, fixed_abs, tag = 'smem constant byte address 0x4 - core index']
  #allocation1 [shape = 'u32[144,128]{1,0:T(1,128)}', space=vmem, size = 0x12000, scoped, tag = 'internal scratch']
  %s0 = inlined_call_operand.vmem [shape: f32[8,10], index: 0, kind: input, shape index: {}]
  %s1 = inlined_call_operand.vmem [shape: f32[10,6], index: 1, kind: input, shape index: {}]
  %s2 = inlined_call_operand.vmem [shape: f32[1,6], index: 2, kind: input, shape index: {}]
  %s3 = inlined_call_operand.vmem [shape: f32[6,128], index: 3, kind: input, shape index: {}]
  %s4 = inlined_call_operand.vmem [shape: f32[1,128], index: 4, kind: input, shape index: {}]
  %s5 = inlined_call_operand.hbm [shape: f32[8,128], index: 5, kind: output, shape index: {}]
  %s6 = sld [smem:[#allocation0]]
  $region30: #{tpu_custom_call.1} parent=0
    _
  %s8 = ssub.s32 1, %s6
  %s9 = scalar_select 0, %s8, %s6
  $region1: #{tpu_custom_call.1} parent=0
    #allocation2 [shape = 'u8[4096]{0}', space=vmem, size = 0x1000, scoped, tag = 'output window, operand 0, single buffered']
    #allocation3 [shape = 's32[1]{0}', space=sflag, size = 0x4, scoped, tag = 'scoped memory for tpu_custom_call.1']
    %10 = vsyncpa [#allocation3], 0
    // Predicated region
    $region2: #{tpu_custom_call.1} parent=1 // pred_check
      _
    $region3: #{tpu_custom_call.1} parent=1 // pred_check_branch
      %12 = sbr.rel (0) target = $region5
    $region4: #{tpu_custom_call.1} parent=1 // pred_region
      _
    $region5: #{tpu_custom_call.1} parent=1 // pred_fallthru
      _
    // Predicated region
    $region6: #{tpu_custom_call.1} parent=1 // pred_check
      _
    $region7: #{tpu_custom_call.1} parent=1 // pred_check_branch
      %14 = sbr.rel (0) target = $region9
    $region8: #{tpu_custom_call.1} parent=1 // pred_region
      _
    $region9: #{tpu_custom_call.1} parent=1 // pred_fallthru
      _
    // Predicated region
    $region10: #{tpu_custom_call.1} parent=1 // pred_check
      _
    $region11: #{tpu_custom_call.1} parent=1 // pred_check_branch
      %16 = sbr.rel (0) target = $region13
    $region12: #{tpu_custom_call.1} parent=1 // pred_region
      _
    $region13: #{tpu_custom_call.1} parent=1 // pred_fallthru
      _
    // Predicated region
    $region14: #{tpu_custom_call.1} parent=1 // pred_check
      _
    $region15: #{tpu_custom_call.1} parent=1 // pred_check_branch
      %18 = sbr.rel (0) target = $region17
    $region16: #{tpu_custom_call.1} parent=1 // pred_region
      _
    $region17: #{tpu_custom_call.1} parent=1 // pred_fallthru
      _
    // Predicated region
    $region18: #{tpu_custom_call.1} parent=1 // pred_check
      _
    $region19: #{tpu_custom_call.1} parent=1 // pred_check_branch
      %20 = sbr.rel (0) target = $region21
    $region20: #{tpu_custom_call.1} parent=1 // pred_region
      _
    $region21: #{tpu_custom_call.1} parent=1 // pred_fallthru
      _
    %v21 = vld [vmem:[%s0] sm:$0xff]
    %v22 = vld [vmem:[%s1] sm:$0xff]
    %v23 = vld [vmem:[%s1 + $0x8] sm:$0x3]
    %v24 = vld [vmem:[%s2] sm:$0x1]
    %v26 = vlaneseq
    %v27 = vshrl.u32 %v26, 7
    %v28 = vsub.s32 0, %v27
    %v29 = vrot.slane %v24, %v28
    %vm31 = vcmask 80896
    %v33 = vsel %vm31, %v21, 0
    %vm35 = vcmask 1041408
    %v37 = vsel %vm35, %v23, 0
    %39 = vmatprep.subr.mxu0 0.0
    %40 = vmatpush1.msra.mxu0 %v22
    %41 = vmatprep.subr.mxu0 0.0
    %42 = vmatpush1.msra.mxu0 %v37
    %43 = vmatprep.subr.mxu0 0.0
    %44 = vmatpush1.msra.mxu0 0.0
    %45 = vmatprep.subr.mxu0 0.0
    %46 = vmatpush1.msra.mxu0 0.0
    %47 = vmatprep.subr.mxu0 0.0
    %48 = vmatpush1.msra.mxu0 0.0
    %49 = vmatprep.subr.mxu0 0.0
    %50 = vmatpush1.msra.mxu0 0.0
    %51 = vmatprep.subr.mxu0 0.0
    %52 = vmatpush1.msra.mxu0 0.0
    %53 = vmatprep.subr.mxu0 0.0
    %54 = vmatpush1.msra.mxu0 0.0
    %55 = vmatprep.subr.mxu0 0.0
    %56 = vmatpush1.msra.mxu0 0.0
    %57 = vmatprep.subr.mxu0 0.0
    %58 = vmatpush1.msra.mxu0 0.0
    %59 = vmatprep.subr.mxu0 0.0
    %60 = vmatpush1.msra.mxu0 0.0
    %61 = vmatprep.subr.mxu0 0.0
    %62 = vmatpush1.msra.mxu0 0.0
    %63 = vmatprep.subr.mxu0 0.0
    %64 = vmatpush1.msra.mxu0 0.0
    %65 = vmatprep.subr.mxu0 0.0
    %66 = vmatpush1.msra.mxu0 0.0
    %67 = vmatprep.subr.mxu0 0.0
    %68 = vmatpush1.msra.mxu0 0.0
    %69 = vmatprep.subr.mxu0 0.0
    %70 = vmatpush1.msra.mxu0 0.0
    %71 = vmatprep.subr.mxu0 0.0
    %72 = vmatpush1.msra.mxu0 0.0
    %73 = vmatprep.subr.mxu0 0.0
    %74 = vmatpush1.msra.mxu0 0.0
    %75 = vmatprep.subr.mxu0 0.0
    %76 = vmatpush1.msra.mxu0 0.0
    %77 = vmatprep.subr.mxu0 0.0
    %78 = vmatpush1.msra.mxu0 0.0
    %79 = vmatprep.subr.mxu0 0.0
    %80 = vmatpush1.msra.mxu0 0.0
    %81 = vmatprep.subr.mxu0 0.0
    %82 = vmatpush1.msra.mxu0 0.0
    %83 = vmatprep.subr.mxu0 0.0
    %84 = vmatpush1.msra.mxu0 0.0
    %85 = vmatprep.subr.mxu0 0.0
    %86 = vmatpush1.msra.mxu0 0.0
    %87 = vmatprep.subr.mxu0 0.0
    %88 = vmatpush1.msra.mxu0 0.0
    %89 = vmatprep.subr.mxu0 0.0
    %90 = vmatpush1.msra.mxu0 0.0
    %91 = vmatprep.subr.mxu0 0.0
    %92 = vmatpush1.msra.mxu0 0.0
    %93 = vmatprep.subr.mxu0 0.0
    %94 = vmatpush1.msra.mxu0 0.0
    %95 = vmatprep.subr.mxu0 0.0
    %96 = vmatpush1.msra.mxu0 0.0
    %97 = vmatprep.subr.mxu0 0.0
    %98 = vmatpush1.msra.mxu0 0.0
    %99 = vmatprep.subr.mxu0 0.0
    %100 = vmatpush1.msra.mxu0 0.0
    %101 = vmatprep.subr.mxu0 0.0
    %102 = vmatpush1.msra.mxu0 0.0
    %103 = vmatprep.mubr.f32.mxu0 0.0
    %104 = vmatmul.mubr.f32.gmra.mrb[0].mxu0 %v33
    %v105 = vpop.f32.mrb[0].mxu0
    %v106 = vadd.f32 %v29, %v105
    %v107 = vpop.f32.mrb[0].mxu0
    %108 = vdwg.mxu0
    %v109 = vmax.f32 %v106, 0.0
    %v110 = vld [vmem:[%s3] sm:$0x3f]
    %v111 = vld [vmem:[%s4] sm:$0x1]
    %v113 = vlaneseq
    %v114 = vshrl.u32 %v113, 7
    %v115 = vsub.s32 0, %v114
    %v116 = vrot.slane %v111, %v115
    %vm118 = vcmask 48128
    %v120 = vsel %vm118, %v109, 0
    %vm122 = vcmask 1045504
    %v124 = vsel %vm122, %v110, 0
    %126 = vmatprep.subr.mxu0 0.0
    %127 = vmatpush1.msra.mxu0 %v124
    %128 = vmatprep.subr.mxu0 0.0
    %129 = vmatpush1.msra.mxu0 0.0
    %130 = vmatprep.subr.mxu0 0.0
    %131 = vmatpush1.msra.mxu0 0.0
    %132 = vmatprep.subr.mxu0 0.0
    %133 = vmatpush1.msra.mxu0 0.0
    %134 = vmatprep.subr.mxu0 0.0
    %135 = vmatpush1.msra.mxu0 0.0
    %136 = vmatprep.subr.mxu0 0.0
    %137 = vmatpush1.msra.mxu0 0.0
    %138 = vmatprep.subr.mxu0 0.0
    %139 = vmatpush1.msra.mxu0 0.0
    %140 = vmatprep.subr.mxu0 0.0
    %141 = vmatpush1.msra.mxu0 0.0
    %142 = vmatprep.subr.mxu0 0.0
    %143 = vmatpush1.msra.mxu0 0.0
    %144 = vmatprep.subr.mxu0 0.0
    %145 = vmatpush1.msra.mxu0 0.0
    %146 = vmatprep.subr.mxu0 0.0
    %147 = vmatpush1.msra.mxu0 0.0
    %148 = vmatprep.subr.mxu0 0.0
    %149 = vmatpush1.msra.mxu0 0.0
    %150 = vmatprep.subr.mxu0 0.0
    %151 = vmatpush1.msra.mxu0 0.0
    %152 = vmatprep.subr.mxu0 0.0
    %153 = vmatpush1.msra.mxu0 0.0
    %154 = vmatprep.subr.mxu0 0.0
    %155 = vmatpush1.msra.mxu0 0.0
    %156 = vmatprep.subr.mxu0 0.0
    %157 = vmatpush1.msra.mxu0 0.0
    %158 = vmatprep.subr.mxu0 0.0
    %159 = vmatpush1.msra.mxu0 0.0
    %160 = vmatprep.subr.mxu0 0.0
    %161 = vmatpush1.msra.mxu0 0.0
    %162 = vmatprep.subr.mxu0 0.0
    %163 = vmatpush1.msra.mxu0 0.0
    %164 = vmatprep.subr.mxu0 0.0
    %165 = vmatpush1.msra.mxu0 0.0
    %166 = vmatprep.subr.mxu0 0.0
    %167 = vmatpush1.msra.mxu0 0.0
    %168 = vmatprep.subr.mxu0 0.0
    %169 = vmatpush1.msra.mxu0 0.0
    %170 = vmatprep.subr.mxu0 0.0
    %171 = vmatpush1.msra.mxu0 0.0
    %172 = vmatprep.subr.mxu0 0.0
    %173 = vmatpush1.msra.mxu0 0.0
    %174 = vmatprep.subr.mxu0 0.0
    %175 = vmatpush1.msra.mxu0 0.0
    %176 = vmatprep.subr.mxu0 0.0
    %177 = vmatpush1.msra.mxu0 0.0
    %178 = vmatprep.subr.mxu0 0.0
    %179 = vmatpush1.msra.mxu0 0.0
    %180 = vmatprep.subr.mxu0 0.0
    %181 = vmatpush1.msra.mxu0 0.0
    %182 = vmatprep.subr.mxu0 0.0
    %183 = vmatpush1.msra.mxu0 0.0
    %184 = vmatprep.subr.mxu0 0.0
    %185 = vmatpush1.msra.mxu0 0.0
    %186 = vmatprep.subr.mxu0 0.0
    %187 = vmatpush1.msra.mxu0 0.0
    %188 = vmatprep.subr.mxu0 0.0
    %189 = vmatpush1.msra.mxu0 0.0
    %190 = vmatprep.mubr.f32.mxu0 0.0
    %191 = vmatmul.mubr.f32.gmra.mrb[0].mxu0 %v120
    %v192 = vpop.f32.mrb[0].mxu0
    %v193 = vadd.f32 %v116, %v192
    %v194 = vpop.f32.mrb[0].mxu0
    %195 = vdwg.mxu0
    %196 = vst [vmem:[#allocation2] sm:$0xff] %v193
    // Predicated region
    $region22: #{tpu_custom_call.1} parent=1 // pred_check
      _
    $region23: #{tpu_custom_call.1} parent=1 // pred_check_branch
      %198 = sbr.rel (0) target = $region25
    $region24: #{tpu_custom_call.1} parent=1 // pred_region
      %s200 = ssub.s32 128, 128
      %201 = vsyncadd [#allocation3], %s200
      %s203 = sshll.u32 [#allocation2], 4
      %s204 = int_to_ptr.vmem [resolvable:$true] %s203
      %206 = dma.vmem_to_hbm [thread:$0]  %s204, 128, %s5, [#allocation3]
    $region25: #{tpu_custom_call.1} parent=1 // pred_fallthru
      _
    // Predicated region
    $region26: #{tpu_custom_call.1} parent=1 // pred_check
      _
    $region27: #{tpu_custom_call.1} parent=1 // pred_check_branch
      %208 = sbr.rel (0) target = $region29
    $region28: #{tpu_custom_call.1} parent=1 // pred_region
      %209 = dma.done [#allocation3], 128
    $region29: #{tpu_custom_call.1} parent=1 // pred_fallthru
      _
    %210 = vsyncpa [#allocation3], 1

</llo_original>
